<compile_context>
chip_gen: v5e
topology: v5e:2x2
jax: 0.10.0
libtpu: 0.0.40
codegen_flags: <defaults>
</compile_context>

<pallas_src>
import jax
import jax.numpy as jnp
from jax import lax
from jax.experimental import pallas as pl
from jax.experimental.pallas import tpu as pltpu

_LANE = 128


def _round_up(v, m):
    return (v + m - 1) // m * m


# --------------------------------------------------------------------------
# Fused encoder + reparameterize + InnerDecoder kernel
# --------------------------------------------------------------------------
def _fused_kernel(x_ref, adj_ref, w1_ref, w23_ref, wa1_ref, wa23_ref,
                  eps_u_ref, eps_a_ref,
                  uv_ref, av_ref, pred_ref,
                  zcat_ref):
    n = adj_ref.shape[0]
    f = x_ref.shape[1]
    h2 = eps_u_ref.shape[-1]

    # bf16 MXU operands, f32 accumulation.
    x_bf = x_ref[...].astype(jnp.bfloat16)
    adj_bf = adj_ref[...].astype(jnp.bfloat16)

    # gc1 (GraphConvolutionSparse, act=relu): relu(adj @ (x @ W1))
    xw1 = jnp.dot(x_bf, w1_ref[...], preferred_element_type=jnp.float32)
    hidden1 = jnp.maximum(
        jnp.dot(adj_bf, xw1.astype(jnp.bfloat16),
                preferred_element_type=jnp.float32), 0.0)

    # gc2 | gc3 fused + reassociated: (adj @ hidden1) @ [W2 | W3 | 0-pad]
    ah1 = jnp.dot(adj_bf, hidden1.astype(jnp.bfloat16),
                  preferred_element_type=jnp.float32)
    uv = jnp.dot(ah1.astype(jnp.bfloat16), w23_ref[...],
                 preferred_element_type=jnp.float32)
    uv_ref[...] = uv                                      # (n, 128) lane-dense

    # linear_a1 (act=tanh) on x.T without materializing the transpose:
    # contract axis 0 of x (n) against axis 0 of W_a1 (n) -> (f, h1)
    ha1 = jnp.tanh(lax.dot_general(
        x_bf, wa1_ref[...],
        dimension_numbers=(((0,), (0,)), ((), ())),
        preferred_element_type=jnp.float32))

    # linear_a2 | linear_a3 fused: ha1 @ [Wa2 | Wa3 | 0-pad]
    av = jnp.dot(ha1.astype(jnp.bfloat16), wa23_ref[...],
                 preferred_element_type=jnp.float32)
    av_ref[...] = av                                      # (f, 128) lane-dense

    # reparameterize (training mode, std = exp(logvar) as in the module)
    mu, logvar = uv[:, :h2], uv[:, h2:2 * h2]
    mu_a, logvar_a = av[:, :h2], av[:, h2:2 * h2]
    z_u = eps_u_ref[...] * jnp.exp(logvar) + mu           # (n, h2) f32
    z_a = eps_a_ref[...] * jnp.exp(logvar_a) + mu_a       # (f, h2) f32

    # InnerDecoder: build [z_u ; z_a ; 0-pad] in a VMEM scratch (no concatenate)
    zcat_ref[...] = jnp.zeros_like(zcat_ref)
    zcat_ref[pl.ds(0, n), :] = z_u
    zcat_ref[pl.ds(n, f), :] = z_a

    # z_u @ zcat.T -> (n, round_up(n+f, 128)) = [pred_adj | pred_x | 0-pad]
    pred_ref[...] = lax.dot_general(
        z_u.astype(jnp.bfloat16), zcat_ref[...].astype(jnp.bfloat16),
        dimension_numbers=(((1,), (1,)), ((), ())),       # contract h2 of both
        preferred_element_type=jnp.float32)


def _full_spec(shape):
    # whole-array block, single grid step
    return pl.BlockSpec(shape, lambda i: tuple(0 for _ in shape))


# --------------------------------------------------------------------------
# One-time parameter preparation (stored-parameter style)
# --------------------------------------------------------------------------
def prepare_params(params):
    h1d, h2d = params["w_gc2"].shape
    slab_w = _round_up(2 * h2d, _LANE)
    zpad = jnp.zeros((h1d, slab_w - 2 * h2d), jnp.float32)
    w23 = jnp.concatenate([params["w_gc2"], params["w_gc3"], zpad], axis=1)
    wa23 = jnp.concatenate([params["w_a2"], params["w_a3"], zpad], axis=1)
    return {
        "w_gc1": params["w_gc1"].astype(jnp.bfloat16),       # (f, h1)
        "w_a1": params["w_a1"].astype(jnp.bfloat16),         # (n, h1)
        "w_gc23_pad": w23.astype(jnp.bfloat16),               # (h1, 128)
        "w_a23_pad": wa23.astype(jnp.bfloat16),                # (h1, 128)
    }


# --------------------------------------------------------------------------
# Forward wrapper
# --------------------------------------------------------------------------
def gcn_vaece_forward(x, adj, prep, eps_u, eps_a):
    n, f = x.shape
    h2 = eps_u.shape[1]
    h1d = prep["w_gc1"].shape[1]
    slab_w = prep["w_gc23_pad"].shape[1]       # round_up(2*h2, 128)
    pred_w = _round_up(n + f, _LANE)

    flops = 2 * (n * f * h1d              # x @ W1
                 + n * n * h1d            # adj @ (x W1)
                 + n * n * h1d            # adj @ hidden1 (reassociated)
                 + n * h1d * slab_w       # ah1 @ [W2|W3|pad]
                 + f * n * h1d            # x.T @ Wa1
                 + f * h1d * slab_w       # ha1 @ [Wa2|Wa3|pad]
                 + n * h2 * pred_w)       # z_u @ zcat.T
    transcendentals = f * h1d + n * h2 + f * h2           # tanh + exp + exp
    bytes_accessed = (4 * (n * f + n * n + n * h2 + f * h2)          # f32 in
                      + 2 * (f * h1d + n * h1d + 2 * h1d * slab_w)   # bf16 in
                      + 4 * (n * slab_w + f * slab_w + n * pred_w))  # f32 out

    fused = pl.pallas_call(
        _fused_kernel,
        grid=(1,),
        in_specs=[
            _full_spec((n, f)),            # x            (f32)
            _full_spec((n, n)),            # adj          (f32)
            _full_spec((f, h1d)),          # W_gc1        (bf16)
            _full_spec((h1d, slab_w)),     # [W_gc2|W_gc3|pad] (bf16)
            _full_spec((n, h1d)),          # W_a1         (bf16)
            _full_spec((h1d, slab_w)),     # [W_a2|W_a3|pad]   (bf16)
            _full_spec((n, h2)),           # eps_u        (f32)
            _full_spec((f, h2)),           # eps_a        (f32)
        ],
        out_specs=[
            _full_spec((n, slab_w)),       # [mu | logvar | pad]
            _full_spec((f, slab_w)),       # [mu_a | logvar_a | pad]
            _full_spec((n, pred_w)),       # [pred_adj | pred_x | pad]
        ],
        out_shape=[
            jax.ShapeDtypeStruct((n, slab_w), jnp.float32),
            jax.ShapeDtypeStruct((f, slab_w), jnp.float32),
            jax.ShapeDtypeStruct((n, pred_w), jnp.float32),
        ],
        scratch_shapes=[pltpu.VMEM((pred_w, h2), jnp.float32)],   # zcat
        compiler_params=pltpu.CompilerParams(
            dimension_semantics=("arbitrary",),
            vmem_limit_bytes=32 * 1024 * 1024),
        cost_estimate=pl.CostEstimate(
            flops=int(flops),
            transcendentals=int(transcendentals),
            bytes_accessed=int(bytes_accessed)),
    )
    uv, av, pred = fused(x, adj, prep["w_gc1"], prep["w_gc23_pad"],
                         prep["w_a1"], prep["w_a23_pad"], eps_u, eps_a)

    mu, logvar = uv[:, :h2], uv[:, h2:2 * h2]
    mu_a, logvar_a = av[:, :h2], av[:, h2:2 * h2]
    pred_adj, pred_x = pred[:, :n], pred[:, n:n + f]
    return (pred_adj, pred_x), mu, logvar, mu_a, logvar_a


# --------------------------------------------------------------------------
# References for verification
# --------------------------------------------------------------------------
def _reference_forward_f32(x, adj, params, eps_u, eps_a):
    # Exact module semantics (original association, f32).
    h1 = jnp.maximum(adj @ (x @ params["w_gc1"]), 0.0)
    mu = adj @ (h1 @ params["w_gc2"])
    logvar = adj @ (h1 @ params["w_gc3"])
    ha1 = jnp.tanh(x.T @ params["w_a1"])
    mu_a = ha1 @ params["w_a2"]
    logvar_a = ha1 @ params["w_a3"]
    z_u = eps_u * jnp.exp(logvar) + mu
    z_a = eps_a * jnp.exp(logvar_a) + mu_a
    return (z_u @ z_u.T, z_u @ z_a.T), mu, logvar, mu_a, logvar_a


def _reference_forward_bf16(x, adj, params, eps_u, eps_a):
    # Same bf16-operand / f32-accumulate matmuls (and gc2/gc3 association)
    # as the kernel, for a tight parity check.
    def bdot(a, b):
        return jnp.dot(a.astype(jnp.bfloat16), b.astype(jnp.bfloat16),
                       preferred_element_type=jnp.float32)
    hidden1 = jnp.maximum(bdot(adj, bdot(x, params["w_gc1"])), 0.0)
    ah1 = bdot(adj, hidden1)
    mu = bdot(ah1, params["w_gc2"])
    logvar = bdot(ah1, params["w_gc3"])
    ha1 = jnp.tanh(bdot(x.T, params["w_a1"]))
    mu_a = bdot(ha1, params["w_a2"])
    logvar_a = bdot(ha1, params["w_a3"])
    z_u = eps_u * jnp.exp(logvar) + mu
    z_a = eps_a * jnp.exp(logvar_a) + mu_a
    return (bdot(z_u, z_u.T), bdot(z_u, z_a.T)), mu, logvar, mu_a, logvar_a


def _glorot(key, shape):
    lim = jnp.sqrt(6.0 / (shape[0] + shape[1]))
    return jax.random.uniform(key, shape, jnp.float32, minval=-lim, maxval=lim)


if __name__ == "__main__":
    # small synthetic sizes consistent with the module
    n_nodes, input_feat_dim = 64, 96
    hidden_dim1, hidden_dim2 = 48, 32
    n_clusters = 4

    key = jax.random.PRNGKey(0)
    keys = jax.random.split(key, 12)

    params = {
        "w_gc1": _glorot(keys[0], (input_feat_dim, hidden_dim1)),
        "w_gc2": _glorot(keys[1], (hidden_dim1, hidden_dim2)),
        "w_gc3": _glorot(keys[2], (hidden_dim1, hidden_dim2)),
        "w_a1": _glorot(keys[3], (n_nodes, hidden_dim1)),
        "w_a2": _glorot(keys[4], (hidden_dim1, hidden_dim2)),
        "w_a3": _glorot(keys[5], (hidden_dim1, hidden_dim2)),
        # cluster params exist in the module but are unused by forward()
        "pi_": jnp.ones((n_clusters,), jnp.float32) / n_clusters,
        "mu_c": jax.random.normal(keys[6], (n_clusters, hidden_dim2), jnp.float32),
        "log_sigma2_c": jax.random.normal(keys[7], (n_clusters, hidden_dim2), jnp.float32),
    }

    # inputs
    x = jax.random.normal(keys[8], (n_nodes, input_feat_dim), jnp.float32)
    adj_raw = (jax.random.uniform(keys[9], (n_nodes, n_nodes)) < 0.1).astype(jnp.float32)
    adj = adj_raw + adj_raw.T + jnp.eye(n_nodes, dtype=jnp.float32)
    deg = jnp.sum(adj, axis=1)
    d_inv_sqrt = 1.0 / jnp.sqrt(deg)
    adj = adj * d_inv_sqrt[:, None] * d_inv_sqrt[None, :]   # symmetric normalization

    # reparameterization noise (torch.randn_like equivalent, fixed here)
    eps_u = jax.random.normal(keys[10], (n_nodes, hidden_dim2), jnp.float32)
    eps_a = jax.random.normal(keys[11], (input_feat_dim, hidden_dim2), jnp.float32)

    prep = prepare_params(params)   # one-time: concat + pad + bf16 cast
    out = gcn_vaece_forward(x, adj, prep, eps_u, eps_a)
    out = jax.block_until_ready(out)

    (p_adj, p_x), mu, logvar, mu_a, logvar_a = out

    # Tight parity check vs a bf16-matmul reference (same arithmetic as kernel).
    ref_b = _reference_forward_bf16(x, adj, params, eps_u, eps_a)
    (rb_adj, rb_x), rb_mu, rb_lv, rb_mua, rb_lva = ref_b
    for got, want in [(p_adj, rb_adj), (p_x, rb_x), (mu, rb_mu), (logvar, rb_lv),
                      (mu_a, rb_mua), (logvar_a, rb_lva)]:
        assert jnp.allclose(got, want, atol=2e-2, rtol=2e-2), "bf16 parity mismatch"

    # Loose semantic check vs the pure-f32 module reference.
    ref_f = _reference_forward_f32(x, adj, params, eps_u, eps_a)
    (rf_adj, rf_x), rf_mu, rf_lv, rf_mua, rf_lva = ref_f
    for got, want in [(p_adj, rf_adj), (p_x, rf_x), (mu, rf_mu), (logvar, rf_lv),
                      (mu_a, rf_mua), (logvar_a, rf_lva)]:
        assert jnp.allclose(got, want, atol=2e-1, rtol=1e-1), "f32 semantic mismatch"

    print("KERNEL_OK")
</pallas_src>

<mosaic_0001>
module attributes {stable_mosaic.version = 11 : i64} {
  func.func @_fused_kernel(%arg0: i32, %arg1: memref<64x96xf32, #tpu.memory_space<vmem>>, %arg2: memref<64x64xf32, #tpu.memory_space<vmem>>, %arg3: memref<96x48xbf16, #tpu.memory_space<vmem>>, %arg4: memref<48x128xbf16, #tpu.memory_space<vmem>>, %arg5: memref<64x48xbf16, #tpu.memory_space<vmem>>, %arg6: memref<48x128xbf16, #tpu.memory_space<vmem>>, %arg7: memref<64x32xf32, #tpu.memory_space<vmem>>, %arg8: memref<96x32xf32, #tpu.memory_space<vmem>>, %arg9: memref<64x128xf32, #tpu.memory_space<vmem>>, %arg10: memref<96x128xf32, #tpu.memory_space<vmem>>, %arg11: memref<64x256xf32, #tpu.memory_space<vmem>>, %arg12: memref<256x32xf32, #tpu.memory_space<vmem>>) attributes {dimension_semantics = [#tpu.dimension_semantics<arbitrary>], iteration_bounds = array<i64: 1>, scalar_prefetch = 0 : i64, scratch_operands = 1 : i64, tpu.core_type = #tpu.core_type<tc>, window_params = [{pipeline_mode = #tpu.pipeline_mode<synchronous>, transform_indices = @transform_0, window_bounds = array<i64: 64, 96>}, {pipeline_mode = #tpu.pipeline_mode<synchronous>, transform_indices = @transform_1, window_bounds = array<i64: 64, 64>}, {pipeline_mode = #tpu.pipeline_mode<synchronous>, transform_indices = @transform_2, window_bounds = array<i64: 96, 48>}, {pipeline_mode = #tpu.pipeline_mode<synchronous>, transform_indices = @transform_3, window_bounds = array<i64: 48, 128>}, {pipeline_mode = #tpu.pipeline_mode<synchronous>, transform_indices = @transform_4, window_bounds = array<i64: 64, 48>}, {pipeline_mode = #tpu.pipeline_mode<synchronous>, transform_indices = @transform_5, window_bounds = array<i64: 48, 128>}, {pipeline_mode = #tpu.pipeline_mode<synchronous>, transform_indices = @transform_6, window_bounds = array<i64: 64, 32>}, {pipeline_mode = #tpu.pipeline_mode<synchronous>, transform_indices = @transform_7, window_bounds = array<i64: 96, 32>}, {pipeline_mode = #tpu.pipeline_mode<synchronous>, transform_indices = @transform_8, window_bounds = array<i64: 64, 128>}, {pipeline_mode = #tpu.pipeline_mode<synchronous>, transform_indices = @transform_9, window_bounds = array<i64: 96, 128>}, {pipeline_mode = #tpu.pipeline_mode<synchronous>, transform_indices = @transform_10, window_bounds = array<i64: 64, 256>}]} {
    %c0 = arith.constant 0 : index
    %c0_0 = arith.constant 0 : index
    %0 = vector.load %arg1[%c0, %c0_0] : memref<64x96xf32, #tpu.memory_space<vmem>>, vector<64x96xf32>
    %1 = arith.truncf %0 : vector<64x96xf32> to vector<64x96xbf16>
    %c0_1 = arith.constant 0 : index
    %c0_2 = arith.constant 0 : index
    %2 = vector.load %arg2[%c0_1, %c0_2] : memref<64x64xf32, #tpu.memory_space<vmem>>, vector<64x64xf32>
    %3 = arith.truncf %2 : vector<64x64xf32> to vector<64x64xbf16>
    %c0_3 = arith.constant 0 : index
    %c0_4 = arith.constant 0 : index
    %4 = vector.load %arg3[%c0_3, %c0_4] : memref<96x48xbf16, #tpu.memory_space<vmem>>, vector<96x48xbf16>
    %cst = arith.constant dense<0.000000e+00> : vector<64x48xf32>
    %5 = tpu.matmul %1, %4, %cst {dimension_numbers = #tpu.dot_dimension_numbers<[1], [0], [0], [1], [0, 0, 1, 1], [], []>} : vector<64x96xbf16>, vector<96x48xbf16>, vector<64x48xf32> -> vector<64x48xf32>
    %6 = arith.truncf %5 : vector<64x48xf32> to vector<64x48xbf16>
    %cst_5 = arith.constant dense<0.000000e+00> : vector<64x48xf32>
    %7 = tpu.matmul %3, %6, %cst_5 {dimension_numbers = #tpu.dot_dimension_numbers<[1], [0], [0], [1], [0, 0, 1, 1], [], []>} : vector<64x64xbf16>, vector<64x48xbf16>, vector<64x48xf32> -> vector<64x48xf32>
    %cst_6 = arith.constant 0.000000e+00 : f32
    %8 = vector.broadcast %cst_6 : f32 to vector<64x48xf32>
    %9 = arith.maximumf %7, %8 : vector<64x48xf32>
    %10 = arith.truncf %9 : vector<64x48xf32> to vector<64x48xbf16>
    %cst_7 = arith.constant dense<0.000000e+00> : vector<64x48xf32>
    %11 = tpu.matmul %3, %10, %cst_7 {dimension_numbers = #tpu.dot_dimension_numbers<[1], [0], [0], [1], [0, 0, 1, 1], [], []>} : vector<64x64xbf16>, vector<64x48xbf16>, vector<64x48xf32> -> vector<64x48xf32>
    %12 = arith.truncf %11 : vector<64x48xf32> to vector<64x48xbf16>
    %c0_8 = arith.constant 0 : index
    %c0_9 = arith.constant 0 : index
    %13 = vector.load %arg4[%c0_8, %c0_9] : memref<48x128xbf16, #tpu.memory_space<vmem>>, vector<48x128xbf16>
    %cst_10 = arith.constant dense<0.000000e+00> : vector<64x128xf32>
    %14 = tpu.matmul %12, %13, %cst_10 {dimension_numbers = #tpu.dot_dimension_numbers<[1], [0], [0], [1], [0, 0, 1, 1], [], []>} : vector<64x48xbf16>, vector<48x128xbf16>, vector<64x128xf32> -> vector<64x128xf32>
    %c0_11 = arith.constant 0 : index
    %c0_12 = arith.constant 0 : index
    %15 = vector.load %arg9[%c0_11, %c0_12] : memref<64x128xf32, #tpu.memory_space<vmem>>, vector<64x128xf32>
    tpu.vector_store %arg9[%c0_11, %c0_12], %14 {strides = array<i32>} : memref<64x128xf32, #tpu.memory_space<vmem>>, vector<64x128xf32>,
    %c0_13 = arith.constant 0 : index
    %c0_14 = arith.constant 0 : index
    %16 = vector.load %arg5[%c0_13, %c0_14] : memref<64x48xbf16, #tpu.memory_space<vmem>>, vector<64x48xbf16>
    %cst_15 = arith.constant dense<0.000000e+00> : vector<96x48xf32>
    %17 = tpu.matmul %1, %16, %cst_15 {dimension_numbers = #tpu.dot_dimension_numbers<[0], [0], [1], [1], [0, 1, 1, 1], [], []>} : vector<64x96xbf16>, vector<64x48xbf16>, vector<96x48xf32> -> vector<96x48xf32>
    %18 = math.tanh %17 : vector<96x48xf32>
    %19 = arith.truncf %18 : vector<96x48xf32> to vector<96x48xbf16>
    %c0_16 = arith.constant 0 : index
    %c0_17 = arith.constant 0 : index
    %20 = vector.load %arg6[%c0_16, %c0_17] : memref<48x128xbf16, #tpu.memory_space<vmem>>, vector<48x128xbf16>
    %cst_18 = arith.constant dense<0.000000e+00> : vector<96x128xf32>
    %21 = tpu.matmul %19, %20, %cst_18 {dimension_numbers = #tpu.dot_dimension_numbers<[1], [0], [0], [1], [0, 0, 1, 1], [], []>} : vector<96x48xbf16>, vector<48x128xbf16>, vector<96x128xf32> -> vector<96x128xf32>
    %c0_19 = arith.constant 0 : index
    %c0_20 = arith.constant 0 : index
    %22 = vector.load %arg10[%c0_19, %c0_20] : memref<96x128xf32, #tpu.memory_space<vmem>>, vector<96x128xf32>
    tpu.vector_store %arg10[%c0_19, %c0_20], %21 {strides = array<i32>} : memref<96x128xf32, #tpu.memory_space<vmem>>, vector<96x128xf32>,
    %23 = vector.extract_strided_slice %14 {offsets = [0, 0], sizes = [64, 32], strides = [1, 1]} : vector<64x128xf32> to vector<64x32xf32>
    %24 = vector.extract_strided_slice %14 {offsets = [0, 32], sizes = [64, 32], strides = [1, 1]} : vector<64x128xf32> to vector<64x32xf32>
    %25 = vector.extract_strided_slice %21 {offsets = [0, 0], sizes = [96, 32], strides = [1, 1]} : vector<96x128xf32> to vector<96x32xf32>
    %26 = vector.extract_strided_slice %21 {offsets = [0, 32], sizes = [96, 32], strides = [1, 1]} : vector<96x128xf32> to vector<96x32xf32>
    %c0_21 = arith.constant 0 : index
    %c0_22 = arith.constant 0 : index
    %27 = vector.load %arg7[%c0_21, %c0_22] : memref<64x32xf32, #tpu.memory_space<vmem>>, vector<64x32xf32>
    %28 = math.exp %24 : vector<64x32xf32>
    %29 = arith.mulf %27, %28 : vector<64x32xf32>
    %30 = arith.addf %29, %23 : vector<64x32xf32>
    %c0_23 = arith.constant 0 : index
    %c0_24 = arith.constant 0 : index
    %31 = vector.load %arg8[%c0_23, %c0_24] : memref<96x32xf32, #tpu.memory_space<vmem>>, vector<96x32xf32>
    %32 = math.exp %26 : vector<96x32xf32>
    %33 = arith.mulf %31, %32 : vector<96x32xf32>
    %34 = arith.addf %33, %25 : vector<96x32xf32>
    %cst_25 = arith.constant 0.000000e+00 : f32
    %35 = vector.broadcast %cst_25 : f32 to vector<256x32xf32>
    %c0_26 = arith.constant 0 : index
    %c0_27 = arith.constant 0 : index
    %36 = vector.load %arg12[%c0_26, %c0_27] : memref<256x32xf32, #tpu.memory_space<vmem>>, vector<256x32xf32>
    tpu.vector_store %arg12[%c0_26, %c0_27], %35 {strides = array<i32>} : memref<256x32xf32, #tpu.memory_space<vmem>>, vector<256x32xf32>,
    %c0_28 = arith.constant 0 : index
    %c0_29 = arith.constant 0 : index
    %37 = vector.load %arg12[%c0_28, %c0_29] : memref<256x32xf32, #tpu.memory_space<vmem>>, vector<64x32xf32>
    tpu.vector_store %arg12[%c0_28, %c0_29], %30 {strides = array<i32>} : memref<256x32xf32, #tpu.memory_space<vmem>>, vector<64x32xf32>,
    %c64 = arith.constant 64 : index
    %c0_30 = arith.constant 0 : index
    %38 = vector.load %arg12[%c64, %c0_30] : memref<256x32xf32, #tpu.memory_space<vmem>>, vector<96x32xf32>
    tpu.vector_store %arg12[%c64, %c0_30], %34 {strides = array<i32>} : memref<256x32xf32, #tpu.memory_space<vmem>>, vector<96x32xf32>,
    %39 = arith.truncf %30 : vector<64x32xf32> to vector<64x32xbf16>
    %c0_31 = arith.constant 0 : index
    %c0_32 = arith.constant 0 : index
    %40 = vector.load %arg12[%c0_31, %c0_32] : memref<256x32xf32, #tpu.memory_space<vmem>>, vector<256x32xf32>
    %41 = arith.truncf %40 : vector<256x32xf32> to vector<256x32xbf16>
    %cst_33 = arith.constant dense<0.000000e+00> : vector<64x256xf32>
    %42 = tpu.matmul %39, %41, %cst_33 {dimension_numbers = #tpu.dot_dimension_numbers<[1], [1], [0], [0], [0, 0, 1, 0], [], []>} : vector<64x32xbf16>, vector<256x32xbf16>, vector<64x256xf32> -> vector<64x256xf32>
    %c0_34 = arith.constant 0 : index
    %c0_35 = arith.constant 0 : index
    %43 = vector.load %arg11[%c0_34, %c0_35] : memref<64x256xf32, #tpu.memory_space<vmem>>, vector<64x256xf32>
    tpu.vector_store %arg11[%c0_34, %c0_35], %42 {strides = array<i32>} : memref<64x256xf32, #tpu.memory_space<vmem>>, vector<64x256xf32>,
    return
  }
  func.func @transform_0(%arg0: i32) -> (i32, i32) {
    %c0_i32 = arith.constant 0 : i32
    %c0_i32_0 = arith.constant 0 : i32
    %c0_i32_1 = arith.constant 0 : i32
    return %c0_i32, %c0_i32_0 : i32, i32
  }
  func.func @transform_1(%arg0: i32) -> (i32, i32) {
    %c0_i32 = arith.constant 0 : i32
    %c0_i32_0 = arith.constant 0 : i32
    %c0_i32_1 = arith.constant 0 : i32
    return %c0_i32, %c0_i32_0 : i32, i32
  }
  func.func @transform_2(%arg0: i32) -> (i32, i32) {
    %c0_i32 = arith.constant 0 : i32
    %c0_i32_0 = arith.constant 0 : i32
    %c0_i32_1 = arith.constant 0 : i32
    return %c0_i32, %c0_i32_0 : i32, i32
  }
  func.func @transform_3(%arg0: i32) -> (i32, i32) {
    %c0_i32 = arith.constant 0 : i32
    %c0_i32_0 = arith.constant 0 : i32
    %c0_i32_1 = arith.constant 0 : i32
    return %c0_i32, %c0_i32_0 : i32, i32
  }
  func.func @transform_4(%arg0: i32) -> (i32, i32) {
    %c0_i32 = arith.constant 0 : i32
    %c0_i32_0 = arith.constant 0 : i32
    %c0_i32_1 = arith.constant 0 : i32
    return %c0_i32, %c0_i32_0 : i32, i32
  }
  func.func @transform_5(%arg0: i32) -> (i32, i32) {
    %c0_i32 = arith.constant 0 : i32
    %c0_i32_0 = arith.constant 0 : i32
    %c0_i32_1 = arith.constant 0 : i32
    return %c0_i32, %c0_i32_0 : i32, i32
  }
  func.func @transform_6(%arg0: i32) -> (i32, i32) {
    %c0_i32 = arith.constant 0 : i32
    %c0_i32_0 = arith.constant 0 : i32
    %c0_i32_1 = arith.constant 0 : i32
    return %c0_i32, %c0_i32_0 : i32, i32
  }
  func.func @transform_7(%arg0: i32) -> (i32, i32) {
    %c0_i32 = arith.constant 0 : i32
    %c0_i32_0 = arith.constant 0 : i32
    %c0_i32_1 = arith.constant 0 : i32
    return %c0_i32, %c0_i32_0 : i32, i32
  }
  func.func @transform_8(%arg0: i32) -> (i32, i32) {
    %c0_i32 = arith.constant 0 : i32
    %c0_i32_0 = arith.constant 0 : i32
    %c0_i32_1 = arith.constant 0 : i32
    return %c0_i32, %c0_i32_0 : i32, i32
  }
  func.func @transform_9(%arg0: i32) -> (i32, i32) {
    %c0_i32 = arith.constant 0 : i32
    %c0_i32_0 = arith.constant 0 : i32
    %c0_i32_1 = arith.constant 0 : i32
    return %c0_i32, %c0_i32_0 : i32, i32
  }
  func.func @transform_10(%arg0: i32) -> (i32, i32) {
    %c0_i32 = arith.constant 0 : i32
    %c0_i32_0 = arith.constant 0 : i32
    %c0_i32_1 = arith.constant 0 : i32
    return %c0_i32, %c0_i32_0 : i32, i32
  }
}

</mosaic_0001>

<llo_original>
// kernel: tpu_custom_call.1
$region0: #{tpu_custom_call.1}
  #allocation0 [shape = 'u32[]', space=smem, size = 0x4, offset = 0x4, fixed_abs, tag = 'smem constant byte address 0x4 - core index']
  #allocation1 [shape = 'u32[72,128]{1,0:T(1,128)}', space=vmem, size = 0x9000, scoped, tag = 'internal scratch']
  #allocation2 [shape = 'f32[256,32]{1,0:T(8,128)}', space=vmem, size = 0x20000, scoped, tag = 'scratch operand']
  %s0 = inlined_call_operand.vmem [shape: f32[64,96], index: 0, kind: input, shape index: {}]
  %s1 = inlined_call_operand.vmem [shape: f32[64,64], index: 1, kind: input, shape index: {}]
  %s2 = inlined_call_operand.vmem [shape: bf16[96,48], index: 2, kind: input, shape index: {}]
  %s3 = inlined_call_operand.vmem [shape: bf16[48,128], index: 3, kind: input, shape index: {}]
  %s4 = inlined_call_operand.vmem [shape: bf16[64,48], index: 4, kind: input, shape index: {}]
  %s5 = inlined_call_operand.vmem [shape: bf16[48,128], index: 5, kind: input, shape index: {}]
  %s6 = inlined_call_operand.vmem [shape: f32[64,32], index: 6, kind: input, shape index: {}]
  %s7 = inlined_call_operand.vmem [shape: f32[96,32], index: 7, kind: input, shape index: {}]
  %s8 = inlined_call_operand.hbm [shape: f32[64,128], index: 8, kind: output, shape index: {0}]
  %s9 = inlined_call_operand.hbm [shape: f32[96,128], index: 9, kind: output, shape index: {1}]
  %s10 = inlined_call_operand.hbm [shape: f32[64,256], index: 10, kind: output, shape index: {2}]
  %11 = xla_tuple %s8, %s9, %s10
  %s12 = sld [smem:[#allocation0]]
  $region58: #{tpu_custom_call.1} parent=0
    _
  %s14 = ssub.s32 1, %s12
  %s15 = scalar_select 0, %s14, %s12
  $region1: #{tpu_custom_call.1} parent=0
    #allocation3 [shape = 'u8[32768]{0}', space=vmem, size = 0x8000, scoped, tag = 'output window, operand 0, single buffered']
    #allocation4 [shape = 's32[1]{0}', space=sflag, size = 0x4, scoped, tag = 'scoped memory for tpu_custom_call.1']
    #allocation5 [shape = 'u8[49152]{0}', space=vmem, size = 0xc000, scoped, tag = 'output window, operand 1, single buffered']
    #allocation6 [shape = 's32[1]{0}', space=sflag, size = 0x4, scoped, tag = 'scoped memory for tpu_custom_call.1']
    #allocation7 [shape = 'u8[65536]{0}', space=vmem, size = 0x10000, scoped, tag = 'output window, operand 2, single buffered']
    %16 = vsyncpa [#allocation4], 0
    %17 = vsyncpa [#allocation6], 0
    // Predicated region
    $region2: #{tpu_custom_call.1} parent=1 // pred_check
      _
    $region3: #{tpu_custom_call.1} parent=1 // pred_check_branch
      %19 = sbr.rel (0) target = $region5
    $region4: #{tpu_custom_call.1} parent=1 // pred_region
      _
    $region5: #{tpu_custom_call.1} parent=1 // pred_fallthru
      _
    // Predicated region
    $region6: #{tpu_custom_call.1} parent=1 // pred_check
      _
    $region7: #{tpu_custom_call.1} parent=1 // pred_check_branch
      %21 = sbr.rel (0) target = $region9
    $region8: #{tpu_custom_call.1} parent=1 // pred_region
      _
    $region9: #{tpu_custom_call.1} parent=1 // pred_fallthru
      _
    // Predicated region
    $region10: #{tpu_custom_call.1} parent=1 // pred_check
      _
    $region11: #{tpu_custom_call.1} parent=1 // pred_check_branch
      %23 = sbr.rel (0) target = $region13
    $region12: #{tpu_custom_call.1} parent=1 // pred_region
      _
    $region13: #{tpu_custom_call.1} parent=1 // pred_fallthru
      _
    // Predicated region
    $region14: #{tpu_custom_call.1} parent=1 // pred_check
      _
    $region15: #{tpu_custom_call.1} parent=1 // pred_check_branch
      %25 = sbr.rel (0) target = $region17
    $region16: #{tpu_custom_call.1} parent=1 // pred_region
      _
    $region17: #{tpu_custom_call.1} parent=1 // pred_fallthru
      _
    // Predicated region
    $region18: #{tpu_custom_call.1} parent=1 // pred_check
      _
    $region19: #{tpu_custom_call.1} parent=1 // pred_check_branch
      %27 = sbr.rel (0) target = $region21
    $region20: #{tpu_custom_call.1} parent=1 // pred_region
      _
    $region21: #{tpu_custom_call.1} parent=1 // pred_fallthru
      _
    // Predicated region
    $region22: #{tpu_custom_call.1} parent=1 // pred_check
      _
    $region23: #{tpu_custom_call.1} parent=1 // pred_check_branch
      %29 = sbr.rel (0) target = $region25
    $region24: #{tpu_custom_call.1} parent=1 // pred_region
      _
    $region25: #{tpu_custom_call.1} parent=1 // pred_fallthru
      _
    // Predicated region
    $region26: #{tpu_custom_call.1} parent=1 // pred_check
      _
    $region27: #{tpu_custom_call.1} parent=1 // pred_check_branch
      %31 = sbr.rel (0) target = $region29
    $region28: #{tpu_custom_call.1} parent=1 // pred_region
      _
    $region29: #{tpu_custom_call.1} parent=1 // pred_fallthru
      _
    // Predicated region
    $region30: #{tpu_custom_call.1} parent=1 // pred_check
      _
    $region31: #{tpu_custom_call.1} parent=1 // pred_check_branch
      %33 = sbr.rel (0) target = $region33
    $region32: #{tpu_custom_call.1} parent=1 // pred_region
      _
    $region33: #{tpu_custom_call.1} parent=1 // pred_fallthru
      _
    %v35 = vld [vmem:[%s0] sm:$0xff]
    %v36 = vld [vmem:[%s0 + $0x8] sm:$0xff]
    %v37 = vld [vmem:[%s0 + $0x10] sm:$0xff]
    %v38 = vld [vmem:[%s0 + $0x18] sm:$0xff]
    %v39 = vld [vmem:[%s0 + $0x20] sm:$0xff]
    %v40 = vld [vmem:[%s0 + $0x28] sm:$0xff]
    %v41 = vld [vmem:[%s0 + $0x30] sm:$0xff]
    %v42 = vld [vmem:[%s0 + $0x38] sm:$0xff]
    %v43 = vpack.c.bf16 %v36, %v35
    %v44 = vpack.c.bf16 %v38, %v37
    %v45 = vpack.c.bf16 %v40, %v39
    %v46 = vpack.c.bf16 %v42, %v41
    %v47 = vld [vmem:[%s1] sm:$0xff]
    %v48 = vld [vmem:[%s1 + $0x8] sm:$0xff]
    %v49 = vld [vmem:[%s1 + $0x10] sm:$0xff]
    %v50 = vld [vmem:[%s1 + $0x18] sm:$0xff]
    %v51 = vld [vmem:[%s1 + $0x20] sm:$0xff]
    %v52 = vld [vmem:[%s1 + $0x28] sm:$0xff]
    %v53 = vld [vmem:[%s1 + $0x30] sm:$0xff]
    %v54 = vld [vmem:[%s1 + $0x38] sm:$0xff]
    %v55 = vpack.c.bf16 %v48, %v47
    %v56 = vpack.c.bf16 %v50, %v49
    %v57 = vpack.c.bf16 %v52, %v51
    %v58 = vpack.c.bf16 %v54, %v53
    %v59 = vld [vmem:[%s2] sm:$0xf]
    %v60 = vld [vmem:[%s2 + $0x4] sm:$0xf]
    %v61 = vld [vmem:[%s2 + $0x8] sm:$0xf]
    %v62 = vld [vmem:[%s2 + $0xc] sm:$0xf]
    %v63 = vld [vmem:[%s2 + $0x10] sm:$0xf]
    %v64 = vld [vmem:[%s2 + $0x14] sm:$0xf]
    %v65 = vld [vmem:[%s2 + $0x18] sm:$0xf]
    %v66 = vld [vmem:[%s2 + $0x1c] sm:$0xf]
    %v67 = vld [vmem:[%s2 + $0x20] sm:$0xf]
    %v68 = vld [vmem:[%s2 + $0x24] sm:$0xf]
    %v69 = vld [vmem:[%s2 + $0x28] sm:$0xf]
    %v70 = vld [vmem:[%s2 + $0x2c] sm:$0xf]
    %v83 = vunpack.c.l.b16 %v59
    %v84 = vunpack.c.l.b16 %v60
    %v85 = vunpack.c.l.b16 %v61
    %v86 = vunpack.c.l.b16 %v62
    %v87 = vunpack.c.l.b16 %v63
    %v88 = vunpack.c.l.b16 %v64
    %v89 = vunpack.c.l.b16 %v65
    %v90 = vunpack.c.l.b16 %v66
    %v91 = vunpack.c.l.b16 %v67
    %v92 = vunpack.c.l.b16 %v68
    %v93 = vunpack.c.l.b16 %v69
    %v94 = vunpack.c.l.b16 %v70
    %v95 = vpack.c.b16 %v84, %v83
    %v96 = vpack.c.b16 %v86, %v85
    %v97 = vpack.c.b16 %v88, %v87
    %v98 = vpack.c.b16 %v90, %v89
    %v99 = vpack.c.b16 %v92, %v91
    %v100 = vpack.c.b16 %v94, %v93
    %vm107 = vcmask 785408
    %v109 = vsel %vm107, %v43, 0
    %v112 = vsel %vm107, %v44, 0
    %v115 = vsel %vm107, %v45, 0
    %v118 = vsel %vm107, %v46, 0
    %120 = vmatpush.bf16.msra.mxu0 0
    %121 = vmatpush.bf16.msra.mxu0 0
    %122 = vmatpush.bf16.msra.mxu0 %v100
    %123 = vmatpush.bf16.msra.mxu0 %v99
    %124 = vmatpush.bf16.msra.mxu0 %v98
    %125 = vmatpush.bf16.msra.mxu0 %v97
    %126 = vmatpush.bf16.msra.mxu0 %v96
    %127 = vmatpush.bf16.msra.mxu0 %v95
    %128 = vmatmul.bf16.gmra.mxu0 %v109
    %v129 = vpop.f32.mrf.mxu0
    %v130 = vadd.f32 0.0, %v129
    %v131 = vpop.f32.mrf.mxu0
    %v132 = vadd.f32 0.0, %v131
    %133 = vmatmul.bf16.gmra.mxu0 %v112
    %v134 = vpop.f32.mrf.mxu0
    %v135 = vadd.f32 0.0, %v134
    %v136 = vpop.f32.mrf.mxu0
    %v137 = vadd.f32 0.0, %v136
    %138 = vmatmul.bf16.gmra.mxu0 %v115
    %v139 = vpop.f32.mrf.mxu0
    %v140 = vadd.f32 0.0, %v139
    %v141 = vpop.f32.mrf.mxu0
    %v142 = vadd.f32 0.0, %v141
    %143 = vmatmul.bf16.gmra.mxu0 %v118
    %v144 = vpop.f32.mrf.mxu0
    %v145 = vadd.f32 0.0, %v144
    %v146 = vpop.f32.mrf.mxu0
    %v147 = vadd.f32 0.0, %v146
    %148 = vdwg.mxu0
    %v149 = vpack.c.bf16 %v132, %v130
    %v150 = vpack.c.bf16 %v137, %v135
    %v151 = vpack.c.bf16 %v142, %v140
    %v152 = vpack.c.bf16 %v147, %v145
    %vm153 = vcmask 523264
    %v155 = vsel %vm153, %v55, 0
    %v158 = vsel %vm153, %v56, 0
    %v161 = vsel %vm153, %v57, 0
    %v164 = vsel %vm153, %v58, 0
    %166 = vmatpush.bf16.msra.mxu0 0
    %167 = vmatpush.bf16.msra.mxu0 0
    %168 = vmatpush.bf16.msra.mxu0 0
    %169 = vmatpush.bf16.msra.mxu0 0
    %170 = vmatpush.bf16.msra.mxu0 %v152
    %171 = vmatpush.bf16.msra.mxu0 %v151
    %172 = vmatpush.bf16.msra.mxu0 %v150
    %173 = vmatpush.bf16.msra.mxu0 %v149
    %174 = vmatmul.bf16.gmra.mxu0 %v155
    %v175 = vpop.f32.mrf.mxu0
    %v176 = vadd.f32 0.0, %v175
    %v177 = vpop.f32.mrf.mxu0
    %v178 = vadd.f32 0.0, %v177
    %179 = vmatmul.bf16.gmra.mxu0 %v158
    %v180 = vpop.f32.mrf.mxu0
    %v181 = vadd.f32 0.0, %v180
    %v182 = vpop.f32.mrf.mxu0
    %v183 = vadd.f32 0.0, %v182
    %184 = vmatmul.bf16.gmra.mxu0 %v161
    %v185 = vpop.f32.mrf.mxu0
    %v186 = vadd.f32 0.0, %v185
    %v187 = vpop.f32.mrf.mxu0
    %v188 = vadd.f32 0.0, %v187
    %189 = vmatmul.bf16.gmra.mxu0 %v164
    %v190 = vpop.f32.mrf.mxu0
    %v191 = vadd.f32 0.0, %v190
    %v192 = vpop.f32.mrf.mxu0
    %v193 = vadd.f32 0.0, %v192
    %194 = vdwg.mxu0
    %v195 = vmax.f32 %v176, 0.0
    %v196 = vmax.f32 %v178, 0.0
    %v197 = vmax.f32 %v181, 0.0
    %v198 = vmax.f32 %v183, 0.0
    %v199 = vmax.f32 %v186, 0.0
    %v200 = vmax.f32 %v188, 0.0
    %v201 = vmax.f32 %v191, 0.0
    %v202 = vmax.f32 %v193, 0.0
    %v203 = vpack.c.bf16 %v196, %v195
    %v204 = vpack.c.bf16 %v198, %v197
    %v205 = vpack.c.bf16 %v200, %v199
    %v206 = vpack.c.bf16 %v202, %v201
    %207 = vmatpush.bf16.msra.mxu0 0
    %208 = vmatpush.bf16.msra.mxu0 0
    %209 = vmatpush.bf16.msra.mxu0 0
    %210 = vmatpush.bf16.msra.mxu0 0
    %211 = vmatpush.bf16.msra.mxu0 %v206
    %212 = vmatpush.bf16.msra.mxu0 %v205
    %213 = vmatpush.bf16.msra.mxu0 %v204
    %214 = vmatpush.bf16.msra.mxu0 %v203
    %215 = vmatmul.bf16.gmra.mxu0 %v155
    %v216 = vpop.f32.mrf.mxu0
    %v217 = vadd.f32 0.0, %v216
    %v218 = vpop.f32.mrf.mxu0
    %v219 = vadd.f32 0.0, %v218
    %220 = vmatmul.bf16.gmra.mxu0 %v158
    %v221 = vpop.f32.mrf.mxu0
    %v222 = vadd.f32 0.0, %v221
    %v223 = vpop.f32.mrf.mxu0
    %v224 = vadd.f32 0.0, %v223
    %225 = vmatmul.bf16.gmra.mxu0 %v161
    %v226 = vpop.f32.mrf.mxu0
    %v227 = vadd.f32 0.0, %v226
    %v228 = vpop.f32.mrf.mxu0
    %v229 = vadd.f32 0.0, %v228
    %230 = vmatmul.bf16.gmra.mxu0 %v164
    %v231 = vpop.f32.mrf.mxu0
    %v232 = vadd.f32 0.0, %v231
    %v233 = vpop.f32.mrf.mxu0
    %v234 = vadd.f32 0.0, %v233
    %235 = vdwg.mxu0
    %v236 = vpack.c.bf16 %v219, %v217
    %v237 = vpack.c.bf16 %v224, %v222
    %v238 = vpack.c.bf16 %v229, %v227
    %v239 = vpack.c.bf16 %v234, %v232
    %v240 = vld [vmem:[%s3] sm:$0xf]
    %v241 = vld [vmem:[%s3 + $0x4] sm:$0xf]
    %v242 = vld [vmem:[%s3 + $0x8] sm:$0xf]
    %v243 = vld [vmem:[%s3 + $0xc] sm:$0xf]
    %v244 = vld [vmem:[%s3 + $0x10] sm:$0xf]
    %v245 = vld [vmem:[%s3 + $0x14] sm:$0xf]
    %v252 = vunpack.c.l.b16 %v240
    %v253 = vunpack.c.l.b16 %v241
    %v254 = vunpack.c.l.b16 %v242
    %v255 = vunpack.c.l.b16 %v243
    %v256 = vunpack.c.l.b16 %v244
    %v257 = vunpack.c.l.b16 %v245
    %v258 = vpack.c.b16 %v253, %v252
    %v259 = vpack.c.b16 %v255, %v254
    %v260 = vpack.c.b16 %v257, %v256
    %vm264 = vcmask 392192
    %v266 = vsel %vm264, %v236, 0
    %v269 = vsel %vm264, %v237, 0
    %v272 = vsel %vm264, %v238, 0
    %v275 = vsel %vm264, %v239, 0
    %277 = vmatpush.bf16.msra.mxu0 0
    %278 = vmatpush.bf16.msra.mxu0 0
    %279 = vmatpush.bf16.msra.mxu0 0
    %280 = vmatpush.bf16.msra.mxu0 0
    %281 = vmatpush.bf16.msra.mxu0 0
    %282 = vmatpush.bf16.msra.mxu0 %v260
    %283 = vmatpush.bf16.msra.mxu0 %v259
    %284 = vmatpush.bf16.msra.mxu0 %v258
    %285 = vmatmul.bf16.gmra.mxu0 %v266
    %v286 = vpop.f32.mrf.mxu0
    %v287 = vadd.f32 0.0, %v286
    %v288 = vpop.f32.mrf.mxu0
    %v289 = vadd.f32 0.0, %v288
    %290 = vmatmul.bf16.gmra.mxu0 %v269
    %v291 = vpop.f32.mrf.mxu0
    %v292 = vadd.f32 0.0, %v291
    %v293 = vpop.f32.mrf.mxu0
    %v294 = vadd.f32 0.0, %v293
    %295 = vmatmul.bf16.gmra.mxu0 %v272
    %v296 = vpop.f32.mrf.mxu0
    %v297 = vadd.f32 0.0, %v296
    %v298 = vpop.f32.mrf.mxu0
    %v299 = vadd.f32 0.0, %v298
    %300 = vmatmul.bf16.gmra.mxu0 %v275
    %v301 = vpop.f32.mrf.mxu0
    %v302 = vadd.f32 0.0, %v301
    %v303 = vpop.f32.mrf.mxu0
    %v304 = vadd.f32 0.0, %v303
    %305 = vdwg.mxu0
    %306 = vst [vmem:[#allocation3] sm:$0xff] %v287
    %307 = vst [vmem:[#allocation3 + $0x8] sm:$0xff] %v289
    %308 = vst [vmem:[#allocation3 + $0x10] sm:$0xff] %v292
    %309 = vst [vmem:[#allocation3 + $0x18] sm:$0xff] %v294
    %310 = vst [vmem:[#allocation3 + $0x20] sm:$0xff] %v297
    %311 = vst [vmem:[#allocation3 + $0x28] sm:$0xff] %v299
    %312 = vst [vmem:[#allocation3 + $0x30] sm:$0xff] %v302
    %313 = vst [vmem:[#allocation3 + $0x38] sm:$0xff] %v304
    %v314 = vld [vmem:[%s4] sm:$0xf]
    %v315 = vld [vmem:[%s4 + $0x4] sm:$0xf]
    %v316 = vld [vmem:[%s4 + $0x8] sm:$0xf]
    %v317 = vld [vmem:[%s4 + $0xc] sm:$0xf]
    %v318 = vld [vmem:[%s4 + $0x10] sm:$0xf]
    %v319 = vld [vmem:[%s4 + $0x14] sm:$0xf]
    %v320 = vld [vmem:[%s4 + $0x18] sm:$0xf]
    %v321 = vld [vmem:[%s4 + $0x1c] sm:$0xf]
    %322 = vxpose.xlu0.c.b16.start [1/8] %v43, 128
    %323 = vxpose.xlu0.c.b16.cont [2/8] %v44, 128
    %324 = vxpose.xlu0.c.b16.cont [3/8] %v45, 128
    %325 = vxpose.xlu0.c.b16.cont [4/8] %v46, 128
    %326 = vxpose.xlu0.c.b16.cont [5/8] 0, 128
    %327 = vxpose.xlu0.c.b16.cont [6/8] 0, 128
    %328 = vxpose.xlu0.c.b16.cont [7/8] 0, 128
    %329 = vxpose.xlu0.c.b16.end [8/8] 0, 128
    %v330 = vpop.trf.xlu0
    %v331 = vpop.trf.xlu0
    %v332 = vpop.trf.xlu0
    %v333 = vpop.trf.xlu0
    %v334 = vpop.trf.xlu0
    %v335 = vpop.trf.xlu0
    %v336 = vpop.trf.xlu0
    %v337 = vpop.trf.xlu0
    %v346 = vunpack.c.l.b16 %v314
    %v347 = vunpack.c.l.b16 %v315
    %v348 = vunpack.c.l.b16 %v316
    %v349 = vunpack.c.l.b16 %v317
    %v350 = vunpack.c.l.b16 %v318
    %v351 = vunpack.c.l.b16 %v319
    %v352 = vunpack.c.l.b16 %v320
    %v353 = vunpack.c.l.b16 %v321
    %v354 = vpack.c.b16 %v347, %v346
    %v355 = vpack.c.b16 %v349, %v348
    %v356 = vpack.c.b16 %v351, %v350
    %v357 = vpack.c.b16 %v353, %v352
    %v363 = vsel %vm153, %v330, 0
    %v366 = vsel %vm153, %v331, 0
    %v369 = vsel %vm153, %v332, 0
    %v372 = vsel %vm153, %v333, 0
    %v375 = vsel %vm153, %v334, 0
    %v378 = vsel %vm153, %v335, 0
    %380 = vmatpush.bf16.msra.mxu0 0
    %381 = vmatpush.bf16.msra.mxu0 0
    %382 = vmatpush.bf16.msra.mxu0 0
    %383 = vmatpush.bf16.msra.mxu0 0
    %384 = vmatpush.bf16.msra.mxu0 %v357
    %385 = vmatpush.bf16.msra.mxu0 %v356
    %386 = vmatpush.bf16.msra.mxu0 %v355
    %387 = vmatpush.bf16.msra.mxu0 %v354
    %388 = vmatmul.bf16.gmra.mxu0 %v363
    %v389 = vpop.f32.mrf.mxu0
    %v390 = vadd.f32 0.0, %v389
    %v391 = vpop.f32.mrf.mxu0
    %v392 = vadd.f32 0.0, %v391
    %393 = vmatmul.bf16.gmra.mxu0 %v366
    %v394 = vpop.f32.mrf.mxu0
    %v395 = vadd.f32 0.0, %v394
    %v396 = vpop.f32.mrf.mxu0
    %v397 = vadd.f32 0.0, %v396
    %398 = vmatmul.bf16.gmra.mxu0 %v369
    %v399 = vpop.f32.mrf.mxu0
    %v400 = vadd.f32 0.0, %v399
    %v401 = vpop.f32.mrf.mxu0
    %v402 = vadd.f32 0.0, %v401
    %403 = vmatmul.bf16.gmra.mxu0 %v372
    %v404 = vpop.f32.mrf.mxu0
    %v405 = vadd.f32 0.0, %v404
    %v406 = vpop.f32.mrf.mxu0
    %v407 = vadd.f32 0.0, %v406
    %408 = vmatmul.bf16.gmra.mxu0 %v375
    %v409 = vpop.f32.mrf.mxu0
    %v410 = vadd.f32 0.0, %v409
    %v411 = vpop.f32.mrf.mxu0
    %v412 = vadd.f32 0.0, %v411
    %413 = vmatmul.bf16.gmra.mxu0 %v378
    %v414 = vpop.f32.mrf.mxu0
    %v415 = vadd.f32 0.0, %v414
    %v416 = vpop.f32.mrf.mxu0
    %v417 = vadd.f32 0.0, %v416
    %418 = vdwg.mxu0
    %v419 = vtanh.pop %v390
    %v420 = vtanh.pop %v392
    %v421 = vtanh.pop %v395
    %v422 = vtanh.pop %v397
    %v423 = vtanh.pop %v400
    %v424 = vtanh.pop %v402
    %v425 = vtanh.pop %v405
    %v426 = vtanh.pop %v407
    %v427 = vtanh.pop %v410
    %v428 = vtanh.pop %v412
    %v429 = vtanh.pop %v415
    %v430 = vtanh.pop %v417
    %v431 = vpack.c.bf16 %v420, %v419
    %v432 = vpack.c.bf16 %v422, %v421
    %v433 = vpack.c.bf16 %v424, %v423
    %v434 = vpack.c.bf16 %v426, %v425
    %v435 = vpack.c.bf16 %v428, %v427
    %v436 = vpack.c.bf16 %v430, %v429
    %v437 = vld [vmem:[%s5] sm:$0xf]
    %v438 = vld [vmem:[%s5 + $0x4] sm:$0xf]
    %v439 = vld [vmem:[%s5 + $0x8] sm:$0xf]
    %v440 = vld [vmem:[%s5 + $0xc] sm:$0xf]
    %v441 = vld [vmem:[%s5 + $0x10] sm:$0xf]
    %v442 = vld [vmem:[%s5 + $0x14] sm:$0xf]
    %v449 = vunpack.c.l.b16 %v437
    %v450 = vunpack.c.l.b16 %v438
    %v451 = vunpack.c.l.b16 %v439
    %v452 = vunpack.c.l.b16 %v440
    %v453 = vunpack.c.l.b16 %v441
    %v454 = vunpack.c.l.b16 %v442
    %v455 = vpack.c.b16 %v450, %v449
    %v456 = vpack.c.b16 %v452, %v451
    %v457 = vpack.c.b16 %v454, %v453
    %v462 = vsel %vm264, %v431, 0
    %v465 = vsel %vm264, %v432, 0
    %v468 = vsel %vm264, %v433, 0
    %v471 = vsel %vm264, %v434, 0
    %v474 = vsel %vm264, %v435, 0
    %v477 = vsel %vm264, %v436, 0
    %479 = vmatpush.bf16.msra.mxu0 0
    %480 = vmatpush.bf16.msra.mxu0 0
    %481 = vmatpush.bf16.msra.mxu0 0
    %482 = vmatpush.bf16.msra.mxu0 0
    %483 = vmatpush.bf16.msra.mxu0 0
    %484 = vmatpush.bf16.msra.mxu0 %v457
    %485 = vmatpush.bf16.msra.mxu0 %v456
    %486 = vmatpush.bf16.msra.mxu0 %v455
    %487 = vmatmul.bf16.gmra.mxu0 %v462
    %v488 = vpop.f32.mrf.mxu0
    %v489 = vadd.f32 0.0, %v488
    %v490 = vpop.f32.mrf.mxu0
    %v491 = vadd.f32 0.0, %v490
    %492 = vmatmul.bf16.gmra.mxu0 %v465
    %v493 = vpop.f32.mrf.mxu0
    %v494 = vadd.f32 0.0, %v493
    %v495 = vpop.f32.mrf.mxu0
    %v496 = vadd.f32 0.0, %v495
    %497 = vmatmul.bf16.gmra.mxu0 %v468
    %v498 = vpop.f32.mrf.mxu0
    %v499 = vadd.f32 0.0, %v498
    %v500 = vpop.f32.mrf.mxu0
    %v501 = vadd.f32 0.0, %v500
    %502 = vmatmul.bf16.gmra.mxu0 %v471
    %v503 = vpop.f32.mrf.mxu0
    %v504 = vadd.f32 0.0, %v503
    %v505 = vpop.f32.mrf.mxu0
    %v506 = vadd.f32 0.0, %v505
    %507 = vmatmul.bf16.gmra.mxu0 %v474
    %v508 = vpop.f32.mrf.mxu0
    %v509 = vadd.f32 0.0, %v508
    %v510 = vpop.f32.mrf.mxu0
    %v511 = vadd.f32 0.0, %v510
    %512 = vmatmul.bf16.gmra.mxu0 %v477
    %v513 = vpop.f32.mrf.mxu0
    %v514 = vadd.f32 0.0, %v513
    %v515 = vpop.f32.mrf.mxu0
    %v516 = vadd.f32 0.0, %v515
    %517 = vdwg.mxu0
    %518 = vst [vmem:[#allocation5] sm:$0xff] %v489
    %519 = vst [vmem:[#allocation5 + $0x8] sm:$0xff] %v491
    %520 = vst [vmem:[#allocation5 + $0x10] sm:$0xff] %v494
    %521 = vst [vmem:[#allocation5 + $0x18] sm:$0xff] %v496
    %522 = vst [vmem:[#allocation5 + $0x20] sm:$0xff] %v499
    %523 = vst [vmem:[#allocation5 + $0x28] sm:$0xff] %v501
    %524 = vst [vmem:[#allocation5 + $0x30] sm:$0xff] %v504
    %525 = vst [vmem:[#allocation5 + $0x38] sm:$0xff] %v506
    %526 = vst [vmem:[#allocation5 + $0x40] sm:$0xff] %v509
    %527 = vst [vmem:[#allocation5 + $0x48] sm:$0xff] %v511
    %528 = vst [vmem:[#allocation5 + $0x50] sm:$0xff] %v514
    %529 = vst [vmem:[#allocation5 + $0x58] sm:$0xff] %v516
    %v530 = vld [vmem:[%s6] sm:$0xff]
    %v531 = vld [vmem:[%s6 + $0x8] sm:$0xff]
    %v532 = vld [vmem:[%s6 + $0x10] sm:$0xff]
    %v533 = vld [vmem:[%s6 + $0x18] sm:$0xff]
    %v534 = vld [vmem:[%s6 + $0x20] sm:$0xff]
    %v535 = vld [vmem:[%s6 + $0x28] sm:$0xff]
    %v536 = vld [vmem:[%s6 + $0x30] sm:$0xff]
    %v537 = vld [vmem:[%s6 + $0x38] sm:$0xff]
    %v538 = vmul.f32 %v287, 1.442695
    %v539 = vpow.pop %v538
    %v540 = vmul.f32 %v289, 1.442695
    %v541 = vpow.pop %v540
    %v542 = vmul.f32 %v292, 1.442695
    %v543 = vpow.pop %v542
    %v544 = vmul.f32 %v294, 1.442695
    %v545 = vpow.pop %v544
    %v546 = vmul.f32 %v297, 1.442695
    %v547 = vpow.pop %v546
    %v548 = vmul.f32 %v299, 1.442695
    %v549 = vpow.pop %v548
    %v550 = vmul.f32 %v302, 1.442695
    %v551 = vpow.pop %v550
    %v552 = vmul.f32 %v304, 1.442695
    %v553 = vpow.pop %v552
    %562 = vrot.lane.b32.xlu0 %v539, 96
    %v563 = vpop.permute.xlu0 %562
    %564 = vrot.lane.b32.xlu0 %v541, 96
    %v565 = vpop.permute.xlu0 %564
    %566 = vrot.lane.b32.xlu0 %v543, 96
    %v567 = vpop.permute.xlu0 %566
    %568 = vrot.lane.b32.xlu0 %v545, 96
    %v569 = vpop.permute.xlu0 %568
    %570 = vrot.lane.b32.xlu0 %v547, 96
    %v571 = vpop.permute.xlu0 %570
    %572 = vrot.lane.b32.xlu0 %v549, 96
    %v573 = vpop.permute.xlu0 %572
    %574 = vrot.lane.b32.xlu0 %v551, 96
    %v575 = vpop.permute.xlu0 %574
    %576 = vrot.lane.b32.xlu0 %v553, 96
    %v577 = vpop.permute.xlu0 %576
    %v586 = vmul.f32 %v530, %v563
    %v587 = vmul.f32 %v531, %v565
    %v588 = vmul.f32 %v532, %v567
    %v589 = vmul.f32 %v533, %v569
    %v590 = vmul.f32 %v534, %v571
    %v591 = vmul.f32 %v535, %v573
    %v592 = vmul.f32 %v536, %v575
    %v593 = vmul.f32 %v537, %v577
    %v594 = vadd.f32 %v586, %v287
    %v595 = vadd.f32 %v587, %v289
    %v596 = vadd.f32 %v588, %v292
    %v597 = vadd.f32 %v589, %v294
    %v598 = vadd.f32 %v590, %v297
    %v599 = vadd.f32 %v591, %v299
    %v600 = vadd.f32 %v592, %v302
    %v601 = vadd.f32 %v593, %v304
    %v602 = vld [vmem:[%s7] sm:$0xff]
    %v603 = vld [vmem:[%s7 + $0x8] sm:$0xff]
    %v604 = vld [vmem:[%s7 + $0x10] sm:$0xff]
    %v605 = vld [vmem:[%s7 + $0x18] sm:$0xff]
    %v606 = vld [vmem:[%s7 + $0x20] sm:$0xff]
    %v607 = vld [vmem:[%s7 + $0x28] sm:$0xff]
    %v608 = vld [vmem:[%s7 + $0x30] sm:$0xff]
    %v609 = vld [vmem:[%s7 + $0x38] sm:$0xff]
    %v610 = vld [vmem:[%s7 + $0x40] sm:$0xff]
    %v611 = vld [vmem:[%s7 + $0x48] sm:$0xff]
    %v612 = vld [vmem:[%s7 + $0x50] sm:$0xff]
    %v613 = vld [vmem:[%s7 + $0x58] sm:$0xff]
    %v614 = vmul.f32 %v489, 1.442695
    %v615 = vpow.pop %v614
    %v616 = vmul.f32 %v491, 1.442695
    %v617 = vpow.pop %v616
    %v618 = vmul.f32 %v494, 1.442695
    %v619 = vpow.pop %v618
    %v620 = vmul.f32 %v496, 1.442695
    %v621 = vpow.pop %v620
    %v622 = vmul.f32 %v499, 1.442695
    %v623 = vpow.pop %v622
    %v624 = vmul.f32 %v501, 1.442695
    %v625 = vpow.pop %v624
    %v626 = vmul.f32 %v504, 1.442695
    %v627 = vpow.pop %v626
    %v628 = vmul.f32 %v506, 1.442695
    %v629 = vpow.pop %v628
    %v630 = vmul.f32 %v509, 1.442695
    %v631 = vpow.pop %v630
    %v632 = vmul.f32 %v511, 1.442695
    %v633 = vpow.pop %v632
    %v634 = vmul.f32 %v514, 1.442695
    %v635 = vpow.pop %v634
    %v636 = vmul.f32 %v516, 1.442695
    %v637 = vpow.pop %v636
    %650 = vrot.lane.b32.xlu0 %v615, 96
    %v651 = vpop.permute.xlu0 %650
    %652 = vrot.lane.b32.xlu0 %v617, 96
    %v653 = vpop.permute.xlu0 %652
    %654 = vrot.lane.b32.xlu0 %v619, 96
    %v655 = vpop.permute.xlu0 %654
    %656 = vrot.lane.b32.xlu0 %v621, 96
    %v657 = vpop.permute.xlu0 %656
    %658 = vrot.lane.b32.xlu0 %v623, 96
    %v659 = vpop.permute.xlu0 %658
    %660 = vrot.lane.b32.xlu0 %v625, 96
    %v661 = vpop.permute.xlu0 %660
    %662 = vrot.lane.b32.xlu0 %v627, 96
    %v663 = vpop.permute.xlu0 %662
    %664 = vrot.lane.b32.xlu0 %v629, 96
    %v665 = vpop.permute.xlu0 %664
    %666 = vrot.lane.b32.xlu0 %v631, 96
    %v667 = vpop.permute.xlu0 %666
    %668 = vrot.lane.b32.xlu0 %v633, 96
    %v669 = vpop.permute.xlu0 %668
    %670 = vrot.lane.b32.xlu0 %v635, 96
    %v671 = vpop.permute.xlu0 %670
    %672 = vrot.lane.b32.xlu0 %v637, 96
    %v673 = vpop.permute.xlu0 %672
    %v686 = vmul.f32 %v602, %v651
    %v687 = vmul.f32 %v603, %v653
    %v688 = vmul.f32 %v604, %v655
    %v689 = vmul.f32 %v605, %v657
    %v690 = vmul.f32 %v606, %v659
    %v691 = vmul.f32 %v607, %v661
    %v692 = vmul.f32 %v608, %v663
    %v693 = vmul.f32 %v609, %v665
    %v694 = vmul.f32 %v610, %v667
    %v695 = vmul.f32 %v611, %v669
    %v696 = vmul.f32 %v612, %v671
    %v697 = vmul.f32 %v613, %v673
    %v698 = vadd.f32 %v686, %v489
    %v699 = vadd.f32 %v687, %v491
    %v700 = vadd.f32 %v688, %v494
    %v701 = vadd.f32 %v689, %v496
    %v702 = vadd.f32 %v690, %v499
    %v703 = vadd.f32 %v691, %v501
    %v704 = vadd.f32 %v692, %v504
    %v705 = vadd.f32 %v693, %v506
    %v706 = vadd.f32 %v694, %v509
    %v707 = vadd.f32 %v695, %v511
    %v708 = vadd.f32 %v696, %v514
    %v709 = vadd.f32 %v697, %v516
    %vm710 = vcmask 261120
    %711 = vst.msk [vmem:[#allocation2] sm:$0xff] %vm710, 0.0
    %712 = vst.msk [vmem:[#allocation2 + $0x8] sm:$0xff] %vm710, 0.0
    %713 = vst.msk [vmem:[#allocation2 + $0x10] sm:$0xff] %vm710, 0.0
    %714 = vst.msk [vmem:[#allocation2 + $0x18] sm:$0xff] %vm710, 0.0
    %715 = vst.msk [vmem:[#allocation2 + $0x20] sm:$0xff] %vm710, 0.0
    %716 = vst.msk [vmem:[#allocation2 + $0x28] sm:$0xff] %vm710, 0.0
    %717 = vst.msk [vmem:[#allocation2 + $0x30] sm:$0xff] %vm710, 0.0
    %718 = vst.msk [vmem:[#allocation2 + $0x38] sm:$0xff] %vm710, 0.0
    %719 = vst.msk [vmem:[#allocation2 + $0x40] sm:$0xff] %vm710, 0.0
    %720 = vst.msk [vmem:[#allocation2 + $0x48] sm:$0xff] %vm710, 0.0
    %721 = vst.msk [vmem:[#allocation2 + $0x50] sm:$0xff] %vm710, 0.0
    %722 = vst.msk [vmem:[#allocation2 + $0x58] sm:$0xff] %vm710, 0.0
    %723 = vst.msk [vmem:[#allocation2 + $0x60] sm:$0xff] %vm710, 0.0
    %724 = vst.msk [vmem:[#allocation2 + $0x68] sm:$0xff] %vm710, 0.0
    %725 = vst.msk [vmem:[#allocation2 + $0x70] sm:$0xff] %vm710, 0.0
    %726 = vst.msk [vmem:[#allocation2 + $0x78] sm:$0xff] %vm710, 0.0
    %727 = vst.msk [vmem:[#allocation2 + $0x80] sm:$0xff] %vm710, 0.0
    %728 = vst.msk [vmem:[#allocation2 + $0x88] sm:$0xff] %vm710, 0.0
    %729 = vst.msk [vmem:[#allocation2 + $0x90] sm:$0xff] %vm710, 0.0
    %730 = vst.msk [vmem:[#allocation2 + $0x98] sm:$0xff] %vm710, 0.0
    %731 = vst.msk [vmem:[#allocation2 + $0xa0] sm:$0xff] %vm710, 0.0
    %732 = vst.msk [vmem:[#allocation2 + $0xa8] sm:$0xff] %vm710, 0.0
    %733 = vst.msk [vmem:[#allocation2 + $0xb0] sm:$0xff] %vm710, 0.0
    %734 = vst.msk [vmem:[#allocation2 + $0xb8] sm:$0xff] %vm710, 0.0
    %735 = vst.msk [vmem:[#allocation2 + $0xc0] sm:$0xff] %vm710, 0.0
    %736 = vst.msk [vmem:[#allocation2 + $0xc8] sm:$0xff] %vm710, 0.0
    %737 = vst.msk [vmem:[#allocation2 + $0xd0] sm:$0xff] %vm710, 0.0
    %738 = vst.msk [vmem:[#allocation2 + $0xd8] sm:$0xff] %vm710, 0.0
    %739 = vst.msk [vmem:[#allocation2 + $0xe0] sm:$0xff] %vm710, 0.0
    %740 = vst.msk [vmem:[#allocation2 + $0xe8] sm:$0xff] %vm710, 0.0
    %741 = vst.msk [vmem:[#allocation2 + $0xf0] sm:$0xff] %vm710, 0.0
    %742 = vst.msk [vmem:[#allocation2 + $0xf8] sm:$0xff] %vm710, 0.0
    %743 = vst.msk [vmem:[#allocation2] sm:$0xff] %vm710, %v594
    %744 = vst.msk [vmem:[#allocation2 + $0x8] sm:$0xff] %vm710, %v595
    %745 = vst.msk [vmem:[#allocation2 + $0x10] sm:$0xff] %vm710, %v596
    %746 = vst.msk [vmem:[#allocation2 + $0x18] sm:$0xff] %vm710, %v597
    %747 = vst.msk [vmem:[#allocation2 + $0x20] sm:$0xff] %vm710, %v598
    %748 = vst.msk [vmem:[#allocation2 + $0x28] sm:$0xff] %vm710, %v599
    %749 = vst.msk [vmem:[#allocation2 + $0x30] sm:$0xff] %vm710, %v600
    %750 = vst.msk [vmem:[#allocation2 + $0x38] sm:$0xff] %vm710, %v601
    %751 = vst.msk [vmem:[#allocation2 + $0x40] sm:$0xff] %vm710, %v698
    %752 = vst.msk [vmem:[#allocation2 + $0x48] sm:$0xff] %vm710, %v699
    %753 = vst.msk [vmem:[#allocation2 + $0x50] sm:$0xff] %vm710, %v700
    %754 = vst.msk [vmem:[#allocation2 + $0x58] sm:$0xff] %vm710, %v701
    %755 = vst.msk [vmem:[#allocation2 + $0x60] sm:$0xff] %vm710, %v702
    %756 = vst.msk [vmem:[#allocation2 + $0x68] sm:$0xff] %vm710, %v703
    %757 = vst.msk [vmem:[#allocation2 + $0x70] sm:$0xff] %vm710, %v704
    %758 = vst.msk [vmem:[#allocation2 + $0x78] sm:$0xff] %vm710, %v705
    %759 = vst.msk [vmem:[#allocation2 + $0x80] sm:$0xff] %vm710, %v706
    %760 = vst.msk [vmem:[#allocation2 + $0x88] sm:$0xff] %vm710, %v707
    %761 = vst.msk [vmem:[#allocation2 + $0x90] sm:$0xff] %vm710, %v708
    %762 = vst.msk [vmem:[#allocation2 + $0x98] sm:$0xff] %vm710, %v709
    %v763 = vpack.c.bf16 %v595, %v594
    %v764 = vpack.c.bf16 %v597, %v596
    %v765 = vpack.c.bf16 %v599, %v598
    %v766 = vpack.c.bf16 %v601, %v600
    %v767 = vld [vmem:[#allocation2] sm:$0xff]
    %v768 = vld [vmem:[#allocation2 + $0x8] sm:$0xff]
    %v769 = vld [vmem:[#allocation2 + $0x10] sm:$0xff]
    %v770 = vld [vmem:[#allocation2 + $0x18] sm:$0xff]
    %v771 = vld [vmem:[#allocation2 + $0x20] sm:$0xff]
    %v772 = vld [vmem:[#allocation2 + $0x28] sm:$0xff]
    %v773 = vld [vmem:[#allocation2 + $0x30] sm:$0xff]
    %v774 = vld [vmem:[#allocation2 + $0x38] sm:$0xff]
    %v775 = vld [vmem:[#allocation2 + $0x40] sm:$0xff]
    %v776 = vld [vmem:[#allocation2 + $0x48] sm:$0xff]
    %v777 = vld [vmem:[#allocation2 + $0x50] sm:$0xff]
    %v778 = vld [vmem:[#allocation2 + $0x58] sm:$0xff]
    %v779 = vld [vmem:[#allocation2 + $0x60] sm:$0xff]
    %v780 = vld [vmem:[#allocation2 + $0x68] sm:$0xff]
    %v781 = vld [vmem:[#allocation2 + $0x70] sm:$0xff]
    %v782 = vld [vmem:[#allocation2 + $0x78] sm:$0xff]
    %v783 = vld [vmem:[#allocation2 + $0x80] sm:$0xff]
    %v784 = vld [vmem:[#allocation2 + $0x88] sm:$0xff]
    %v785 = vld [vmem:[#allocation2 + $0x90] sm:$0xff]
    %v786 = vld [vmem:[#allocation2 + $0x98] sm:$0xff]
    %v787 = vld [vmem:[#allocation2 + $0xa0] sm:$0xff]
    %v788 = vld [vmem:[#allocation2 + $0xa8] sm:$0xff]
    %v789 = vld [vmem:[#allocation2 + $0xb0] sm:$0xff]
    %v790 = vld [vmem:[#allocation2 + $0xb8] sm:$0xff]
    %v791 = vld [vmem:[#allocation2 + $0xc0] sm:$0xff]
    %v792 = vld [vmem:[#allocation2 + $0xc8] sm:$0xff]
    %v793 = vld [vmem:[#allocation2 + $0xd0] sm:$0xff]
    %v794 = vld [vmem:[#allocation2 + $0xd8] sm:$0xff]
    %v795 = vld [vmem:[#allocation2 + $0xe0] sm:$0xff]
    %v796 = vld [vmem:[#allocation2 + $0xe8] sm:$0xff]
    %v797 = vld [vmem:[#allocation2 + $0xf0] sm:$0xff]
    %v798 = vld [vmem:[#allocation2 + $0xf8] sm:$0xff]
    %v799 = vpack.c.bf16 %v768, %v767
    %v800 = vpack.c.bf16 %v770, %v769
    %v801 = vpack.c.bf16 %v772, %v771
    %v802 = vpack.c.bf16 %v774, %v773
    %v803 = vpack.c.bf16 %v776, %v775
    %v804 = vpack.c.bf16 %v778, %v777
    %v805 = vpack.c.bf16 %v780, %v779
    %v806 = vpack.c.bf16 %v782, %v781
    %v807 = vpack.c.bf16 %v784, %v783
    %v808 = vpack.c.bf16 %v786, %v785
    %v809 = vpack.c.bf16 %v788, %v787
    %v810 = vpack.c.bf16 %v790, %v789
    %v811 = vpack.c.bf16 %v792, %v791
    %v812 = vpack.c.bf16 %v794, %v793
    %v813 = vpack.c.bf16 %v796, %v795
    %v814 = vpack.c.bf16 %v798, %v797
    %v816 = vsel %vm710, %v763, 0
    %v819 = vsel %vm710, %v764, 0
    %v822 = vsel %vm710, %v765, 0
    %v825 = vsel %vm710, %v766, 0
    %v828 = vsel %vm710, %v799, 0
    %v831 = vsel %vm710, %v800, 0
    %v834 = vsel %vm710, %v801, 0
    %v837 = vsel %vm710, %v802, 0
    %v840 = vsel %vm710, %v803, 0
    %v843 = vsel %vm710, %v804, 0
    %v846 = vsel %vm710, %v805, 0
    %v849 = vsel %vm710, %v806, 0
    %v852 = vsel %vm710, %v807, 0
    %v855 = vsel %vm710, %v808, 0
    %v858 = vsel %vm710, %v809, 0
    %v861 = vsel %vm710, %v810, 0
    %v864 = vsel %vm710, %v811, 0
    %v867 = vsel %vm710, %v812, 0
    %v870 = vsel %vm710, %v813, 0
    %v873 = vsel %vm710, %v814, 0
    %875 = vmatpush.bf16.xpose.msra.mxu0 %v849
    %876 = vmatpush.bf16.xpose.msra.mxu0 %v846
    %877 = vmatpush.bf16.xpose.msra.mxu0 %v843
    %878 = vmatpush.bf16.xpose.msra.mxu0 %v840
    %879 = vmatpush.bf16.xpose.msra.mxu0 %v837
    %880 = vmatpush.bf16.xpose.msra.mxu0 %v834
    %881 = vmatpush.bf16.xpose.msra.mxu0 %v831
    %882 = vmatpush.bf16.xpose.msra.mxu0 %v828
    %883 = vmatmul.bf16.gmra.mxu0 %v816
    %v884 = vpop.f32.mrf.mxu0
    %v885 = vadd.f32 0.0, %v884
    %v886 = vpop.f32.mrf.mxu0
    %v887 = vadd.f32 0.0, %v886
    %888 = vmatmul.bf16.gmra.mxu0 %v819
    %v889 = vpop.f32.mrf.mxu0
    %v890 = vadd.f32 0.0, %v889
    %v891 = vpop.f32.mrf.mxu0
    %v892 = vadd.f32 0.0, %v891
    %893 = vmatmul.bf16.gmra.mxu0 %v822
    %v894 = vpop.f32.mrf.mxu0
    %v895 = vadd.f32 0.0, %v894
    %v896 = vpop.f32.mrf.mxu0
    %v897 = vadd.f32 0.0, %v896
    %898 = vmatmul.bf16.gmra.mxu0 %v825
    %v899 = vpop.f32.mrf.mxu0
    %v900 = vadd.f32 0.0, %v899
    %v901 = vpop.f32.mrf.mxu0
    %v902 = vadd.f32 0.0, %v901
    %903 = vdwg.mxu0
    %904 = vmatpush.bf16.xpose.msra.mxu0 %v873
    %905 = vmatpush.bf16.xpose.msra.mxu0 %v870
    %906 = vmatpush.bf16.xpose.msra.mxu0 %v867
    %907 = vmatpush.bf16.xpose.msra.mxu0 %v864
    %908 = vmatpush.bf16.xpose.msra.mxu0 %v861
    %909 = vmatpush.bf16.xpose.msra.mxu0 %v858
    %910 = vmatpush.bf16.xpose.msra.mxu0 %v855
    %911 = vmatpush.bf16.xpose.msra.mxu0 %v852
    %912 = vmatmul.bf16.gmra.mxu0 %v816
    %v913 = vpop.f32.mrf.mxu0
    %v914 = vadd.f32 0.0, %v913
    %v915 = vpop.f32.mrf.mxu0
    %v916 = vadd.f32 0.0, %v915
    %917 = vmatmul.bf16.gmra.mxu0 %v819
    %v918 = vpop.f32.mrf.mxu0
    %v919 = vadd.f32 0.0, %v918
    %v920 = vpop.f32.mrf.mxu0
    %v921 = vadd.f32 0.0, %v920
    %922 = vmatmul.bf16.gmra.mxu0 %v822
    %v923 = vpop.f32.mrf.mxu0
    %v924 = vadd.f32 0.0, %v923
    %v925 = vpop.f32.mrf.mxu0
    %v926 = vadd.f32 0.0, %v925
    %927 = vmatmul.bf16.gmra.mxu0 %v825
    %v928 = vpop.f32.mrf.mxu0
    %v929 = vadd.f32 0.0, %v928
    %v930 = vpop.f32.mrf.mxu0
    %v931 = vadd.f32 0.0, %v930
    %932 = vdwg.mxu0
    %933 = vst [vmem:[#allocation7] sm:$0xff] %v885
    %934 = vst [vmem:[#allocation7 + $0x8] sm:$0xff] %v914
    %935 = vst [vmem:[#allocation7 + $0x10] sm:$0xff] %v887
    %936 = vst [vmem:[#allocation7 + $0x18] sm:$0xff] %v916
    %937 = vst [vmem:[#allocation7 + $0x20] sm:$0xff] %v890
    %938 = vst [vmem:[#allocation7 + $0x28] sm:$0xff] %v919
    %939 = vst [vmem:[#allocation7 + $0x30] sm:$0xff] %v892
    %940 = vst [vmem:[#allocation7 + $0x38] sm:$0xff] %v921
    %941 = vst [vmem:[#allocation7 + $0x40] sm:$0xff] %v895
    %942 = vst [vmem:[#allocation7 + $0x48] sm:$0xff] %v924
    %943 = vst [vmem:[#allocation7 + $0x50] sm:$0xff] %v897
    %944 = vst [vmem:[#allocation7 + $0x58] sm:$0xff] %v926
    %945 = vst [vmem:[#allocation7 + $0x60] sm:$0xff] %v900
    %946 = vst [vmem:[#allocation7 + $0x68] sm:$0xff] %v929
    %947 = vst [vmem:[#allocation7 + $0x70] sm:$0xff] %v902
    %948 = vst [vmem:[#allocation7 + $0x78] sm:$0xff] %v931
    // Predicated region
    $region34: #{tpu_custom_call.1} parent=1 // pred_check
      _
    $region35: #{tpu_custom_call.1} parent=1 // pred_check_branch
      %950 = sbr.rel (0) target = $region37
    $region36: #{tpu_custom_call.1} parent=1 // pred_region
      %952 = vsyncadd [#allocation4], 0
      %s953 = sshll.u32 [#allocation3], 4
      %s954 = int_to_ptr.vmem [resolvable:$true] %s953
      %s955 = sshll.u32 %s8, 4
      %s956 = int_to_ptr.hbm [resolvable:$true] %s955
      %961 = dma.vmem_to_hbm [thread:$0]  %s954, 1024, %s956, [#allocation4], 128, 128, 8
    $region37: #{tpu_custom_call.1} parent=1 // pred_fallthru
      _
    // Predicated region
    $region38: #{tpu_custom_call.1} parent=1 // pred_check
      _
    $region39: #{tpu_custom_call.1} parent=1 // pred_check_branch
      %963 = sbr.rel (0) target = $region41
    $region40: #{tpu_custom_call.1} parent=1 // pred_region
      %965 = vsyncadd [#allocation6], 0
      %s966 = sshll.u32 [#allocation5], 4
      %s967 = int_to_ptr.vmem [resolvable:$true] %s966
      %s968 = sshll.u32 %s9, 4
      %s969 = int_to_ptr.hbm [resolvable:$true] %s968
      %974 = dma.vmem_to_hbm [thread:$0]  %s967, 1536, %s969, [#allocation6], 128, 128, 8
    $region41: #{tpu_custom_call.1} parent=1 // pred_fallthru
      _
    // Predicated region
    $region42: #{tpu_custom_call.1} parent=1 // pred_check
      _
    $region43: #{tpu_custom_call.1} parent=1 // pred_check_branch
      %976 = sbr.rel (0) target = $region45
    $region44: #{tpu_custom_call.1} parent=1 // pred_region
      %978 = vsyncadd [#allocation6], 0
      %s979 = sshll.u32 [#allocation7], 4
      %s980 = int_to_ptr.vmem [resolvable:$true] %s979
      %s981 = sshll.u32 %s10, 4
      %s982 = int_to_ptr.hbm [resolvable:$true] %s981
      %987 = dma.vmem_to_hbm [thread:$0]  %s980, 2048, %s982, [#allocation6], 256, 256, 16
    $region45: #{tpu_custom_call.1} parent=1 // pred_fallthru
      _
    // Predicated region
    $region46: #{tpu_custom_call.1} parent=1 // pred_check
      _
    $region47: #{tpu_custom_call.1} parent=1 // pred_check_branch
      %989 = sbr.rel (0) target = $region49
    $region48: #{tpu_custom_call.1} parent=1 // pred_region
      %991 = dma.done [#allocation4], 1024
    $region49: #{tpu_custom_call.1} parent=1 // pred_fallthru
      _
    // Predicated region
    $region50: #{tpu_custom_call.1} parent=1 // pred_check
      _
    $region51: #{tpu_custom_call.1} parent=1 // pred_check_branch
      %993 = sbr.rel (0) target = $region53
    $region52: #{tpu_custom_call.1} parent=1 // pred_region
      %995 = dma.done [#allocation6], 1536
    $region53: #{tpu_custom_call.1} parent=1 // pred_fallthru
      _
    // Predicated region
    $region54: #{tpu_custom_call.1} parent=1 // pred_check
      _
    $region55: #{tpu_custom_call.1} parent=1 // pred_check_branch
      %997 = sbr.rel (0) target = $region57
    $region56: #{tpu_custom_call.1} parent=1 // pred_region
      %999 = dma.done [#allocation6], 2048
    $region57: #{tpu_custom_call.1} parent=1 // pred_fallthru
      _
    %1000 = vsyncpa [#allocation4], 1
    %1001 = vsyncpa [#allocation6], 1

</llo_original>
